<compile_context>
chip_gen: v5e
topology: v5e:2x2
jax: 0.10.0
libtpu: 0.0.40
codegen_flags: <defaults>
</compile_context>

<pallas_src>
import functools

import jax
import jax.numpy as jnp
from jax.experimental import pallas as pl
from jax.experimental.pallas import tpu as pltpu

LANES = 128
EPS = 1e-8
TARGET_BLOCK_BYTES = 2 * 1024 * 1024       # ~2 MiB of input bytes per two-pass block
FAST_PATH_MAX_F32_BYTES = 2 * 1024 * 1024  # fused path: f32 slab <= 2 MiB


def _round_up(n, m):
    return -(-n // m) * m


# ---------------------------------------------------------------------------
# Fused fast path: whole tensor VMEM-resident, one launch, 2x HBM traffic.
# ---------------------------------------------------------------------------
def _fused_quant_ceil_kernel(x_ref, o_ref, *, qmin, qmax):
    c = jnp.ceil(x_ref[...].astype(jnp.float32))
    stat = jnp.max(jnp.abs(c))                       # per-tensor abs-max of ceil(x)
    scale = jnp.maximum(stat / qmax, EPS)
    inv_scale = 1.0 / scale
    q = jnp.clip(jnp.round(c * inv_scale), qmin, qmax) * scale
    o_ref[...] = q.astype(o_ref.dtype)


# ---------------------------------------------------------------------------
# Pass 1: per-block (8,128) lane-dense partial max(|ceil(x)|)
# ---------------------------------------------------------------------------
def _absmax_ceil_kernel(x_ref, pmax_ref, *, rows_total, tile_r, ragged):
    a = jnp.abs(jnp.ceil(x_ref[...].astype(jnp.float32)))
    if ragged:
        # The last block reads past the end of the array; those values are
        # unspecified, so zero them (0 is the identity for an abs-max).
        row = (jax.lax.broadcasted_iota(jnp.int32, a.shape, 0)
               + pl.program_id(0) * tile_r)
        a = jnp.where(row < rows_total, a, 0.0)
    # (tile_r,128) -> (tile_r//8, 8, 128) is layout-preserving (whole native
    # (8,128) tiles), so the fold below is pure VPU vmax, no per-step XLU reduce.
    pmax_ref[...] = jnp.max(a.reshape(-1, 8, LANES), axis=0)


# ---------------------------------------------------------------------------
# Pass 2: out = fake_quant(ceil(x), scale); scale & 1/scale from SMEM
# ---------------------------------------------------------------------------
def _quant_ceil_kernel(sc_ref, x_ref, o_ref, *, qmin, qmax):
    c = jnp.ceil(x_ref[...].astype(jnp.float32))
    scale = sc_ref[0]
    inv_scale = sc_ref[1]
    q = jnp.clip(jnp.round(c * inv_scale), qmin, qmax) * scale
    o_ref[...] = q.astype(o_ref.dtype)


def quant_ceil(x, bits: int = 8, *, fast_path_max_bytes: int = FAST_PATH_MAX_F32_BYTES):
    """Pallas QuantCeil: fake_quant(ceil(x)) with per-tensor signed scale."""
    orig_shape = x.shape
    orig_dtype = x.dtype
    total = x.size

    qmax = float(2 ** (bits - 1) - 1)   # e.g.  127 for 8 bits
    qmin = float(-(2 ** (bits - 1)))    # e.g. -128 for 8 bits

    # Lane-dense 2D slab (rows, 128).  For lane-aligned sizes (the common case)
    # this reshape is a free bitcast; only total % 128 != 0 pays one pad copy
    # (zeros are harmless: ceil(0) = 0 cannot perturb the abs-max statistic).
    flat = x.reshape(-1)
    padded_total = _round_up(total, LANES)
    if padded_total != total:
        flat = jnp.pad(flat, (0, padded_total - total))
    rows = padded_total // LANES
    x2d = flat.reshape(rows, LANES)

    if rows * LANES * 4 <= fast_path_max_bytes:
        # ---------------- fused single-launch path (small / medium) ----------------
        full_spec = pl.BlockSpec((rows, LANES), lambda: (0, 0))
        out2d = pl.pallas_call(
            functools.partial(_fused_quant_ceil_kernel, qmin=qmin, qmax=qmax),
            out_shape=jax.ShapeDtypeStruct((rows, LANES), orig_dtype),
            in_specs=[full_spec],
            out_specs=full_spec,
        )(x2d)
    else:
        # ---------------- two-pass path (large tensors, HBM-bound) ----------------
        itemsize = jnp.dtype(orig_dtype).itemsize
        max_tile_r = max(8, (TARGET_BLOCK_BYTES // (LANES * itemsize)) // 8 * 8)
        # >= 2 blocks so the "parallel" grid axis can split across v7x's 2 TCs.
        tile_r = max(8, min(max_tile_r, _round_up(-(-rows // 2), 8)))
        nblk = -(-rows // tile_r)
        ragged = (rows % tile_r) != 0

        tile_spec = pl.BlockSpec((tile_r, LANES), lambda i: (i, 0))
        smem_spec = pl.BlockSpec(memory_space=pltpu.MemorySpace.SMEM)

        # Pass 1: per-block (8,128) partial abs-max of ceil(x).
        pmax = pl.pallas_call(
            functools.partial(_absmax_ceil_kernel, rows_total=rows,
                              tile_r=tile_r, ragged=ragged),
            out_shape=jax.ShapeDtypeStruct((nblk * 8, LANES), jnp.float32),
            grid=(nblk,),
            in_specs=[tile_spec],
            out_specs=pl.BlockSpec((8, LANES), lambda i: (i, 0)),
            compiler_params=pltpu.CompilerParams(dimension_semantics=("parallel",)),
        )(x2d)

        # Tiny fused XLA glue (a few KiB): final reduce + scale + reciprocal.
        stat = jnp.max(pmax)
        scale = jnp.maximum(stat / qmax, EPS).astype(jnp.float32)
        inv_scale = (1.0 / scale).astype(jnp.float32)
        scales = jnp.stack([scale, inv_scale])          # (2,) f32 -> SMEM

        # Pass 2: out = clip(round(ceil(x) * 1/scale)) * scale.
        out2d = pl.pallas_call(
            functools.partial(_quant_ceil_kernel, qmin=qmin, qmax=qmax),
            out_shape=jax.ShapeDtypeStruct((rows, LANES), orig_dtype),
            grid=(nblk,),
            in_specs=[smem_spec, tile_spec],
            out_specs=tile_spec,
            compiler_params=pltpu.CompilerParams(dimension_semantics=("parallel",)),
        )(scales, x2d)

    out_flat = out2d.reshape(-1)
    if padded_total != total:
        out_flat = out_flat[:total]
    return out_flat.reshape(orig_shape)


def _reference_quant_ceil(x, bits: int = 8):
    """Pure-JAX reference with the identical scale / reciprocal convention."""
    qmax = float(2 ** (bits - 1) - 1)
    qmin = float(-(2 ** (bits - 1)))
    c = jnp.ceil(x.astype(jnp.float32))
    scale = jnp.maximum(jnp.max(jnp.abs(c)) / qmax, EPS).astype(jnp.float32)
    inv_scale = (1.0 / scale).astype(jnp.float32)
    return (jnp.clip(jnp.round(c * inv_scale), qmin, qmax) * scale).astype(x.dtype)


if __name__ == "__main__":
    key = jax.random.PRNGKey(0)

    # Module-consistent small activation (NCHW): exercises the fused fast path.
    x = jax.random.normal(key, (2, 4, 16, 16), dtype=jnp.float32)
    out = jax.block_until_ready(quant_ceil(x, bits=8))
    ref = _reference_quant_ceil(x, bits=8)
    assert out.shape == x.shape and out.dtype == x.dtype
    assert jnp.allclose(out, ref, atol=1e-5, rtol=1e-5), "fast path mismatch"

    # Sanity-check the two-pass path (forced), including a ragged tail block.
    x2 = jax.random.normal(key, (1000, 384), dtype=jnp.float32)
    out2 = jax.block_until_ready(quant_ceil(x2, bits=8, fast_path_max_bytes=0))
    ref2 = _reference_quant_ceil(x2, bits=8)
    assert jnp.allclose(out2, ref2, atol=1e-5, rtol=1e-5), "two-pass path mismatch"

    print("KERNEL_OK")
</pallas_src>

<mosaic_0001>
module attributes {stable_mosaic.version = 11 : i64} {
  func.func @_fused_quant_ceil_kernel(%arg0: memref<16x128xf32, #tpu.memory_space<vmem>>, %arg1: memref<16x128xf32, #tpu.memory_space<vmem>>) attributes {dimension_semantics = [], scalar_prefetch = 0 : i64, scratch_operands = 0 : i64, tpu.core_type = #tpu.core_type<tc>} {
    %c0 = arith.constant 0 : index
    %c0_0 = arith.constant 0 : index
    %0 = vector.load %arg0[%c0, %c0_0] : memref<16x128xf32, #tpu.memory_space<vmem>>, vector<16x128xf32>
    %1 = math.ceil %0 : vector<16x128xf32>
    %2 = math.absf %1 : vector<16x128xf32>
    %3 = vector.shape_cast %2 : vector<16x128xf32> to vector<1x16x128xf32>
    %cst = arith.constant dense<0xFF800000> : vector<1xf32>
    %4 = vector.multi_reduction <maximumf>, %3, %cst [1, 2] : vector<1x16x128xf32> to vector<1xf32>
    %5 = vector.shape_cast %4 : vector<1xf32> to vector<1x1x1xf32>
    %6 = vector.extract %5[0, 0, 0] : f32 from vector<1x1x1xf32>
    %cst_1 = arith.constant 1.270000e+02 : f32
    %7 = arith.divf %6, %cst_1 : f32
    %cst_2 = arith.constant 9.99999993E-9 : f32
    %8 = arith.maximumf %7, %cst_2 : f32
    %cst_3 = arith.constant 1.000000e+00 : f32
    %9 = arith.divf %cst_3, %8 : f32
    %10 = vector.broadcast %9 : f32 to vector<16x128xf32>
    %11 = arith.mulf %1, %10 : vector<16x128xf32>
    %12 = math.roundeven %11 : vector<16x128xf32>
    %cst_4 = arith.constant -1.280000e+02 : f32
    %cst_5 = arith.constant 1.270000e+02 : f32
    %13 = vector.broadcast %cst_4 : f32 to vector<16x128xf32>
    %14 = arith.maximumf %13, %12 : vector<16x128xf32>
    %15 = vector.broadcast %cst_5 : f32 to vector<16x128xf32>
    %16 = arith.minimumf %15, %14 : vector<16x128xf32>
    %17 = vector.broadcast %8 : f32 to vector<16x128xf32>
    %18 = arith.mulf %16, %17 : vector<16x128xf32>
    %c0_6 = arith.constant 0 : index
    %c0_7 = arith.constant 0 : index
    %19 = vector.load %arg1[%c0_6, %c0_7] : memref<16x128xf32, #tpu.memory_space<vmem>>, vector<16x128xf32>
    tpu.vector_store %arg1[%c0_6, %c0_7], %18 {strides = array<i32>} : memref<16x128xf32, #tpu.memory_space<vmem>>, vector<16x128xf32>,
    return
  }
}

</mosaic_0001>

<llo_original>
// kernel: tpu_custom_call.1
$region0: #{tpu_custom_call.1}
  #allocation0 [shape = 'u32[]', space=smem, size = 0x4, offset = 0x4, fixed_abs, tag = 'smem constant byte address 0x4 - core index']
  #allocation1 [shape = 'u32[72,128]{1,0:T(1,128)}', space=vmem, size = 0x9000, scoped, tag = 'internal scratch']
  %s0 = inlined_call_operand.hbm [shape: f32[16,128], index: 0, kind: input, shape index: {}]
  %s1 = inlined_call_operand.hbm [shape: f32[16,128], index: 1, kind: output, shape index: {}]
  %s2 = sld [smem:[#allocation0]]
  $region18: #{tpu_custom_call.1} parent=0
    _
  %s4 = ssub.s32 1, %s2
  %s5 = scalar_select 0, %s4, %s2
  $region1: #{tpu_custom_call.1} parent=0
    #allocation2 [shape = 'u8[8192]{0}', space=vmem, size = 0x2000, scoped, tag = 'input window, operand 0, single buffered']
    #allocation3 [shape = 's32[1]{0}', space=sflag, size = 0x4, scoped, tag = 'scoped memory for tpu_custom_call.1']
    #allocation4 [shape = 's32[1]{0}', space=sflag, size = 0x4, scoped, tag = 'scoped memory for tpu_custom_call.1']
    #allocation5 [shape = 'u8[8192]{0}', space=vmem, size = 0x2000, scoped, tag = 'output window, operand 0, single buffered']
    %6 = vsyncpa [#allocation3], 0
    %7 = vsyncpa [#allocation4], 0
    // Predicated region
    $region2: #{tpu_custom_call.1} parent=1 // pred_check
      _
    $region3: #{tpu_custom_call.1} parent=1 // pred_check_branch
      %9 = sbr.rel (0) target = $region5
    $region4: #{tpu_custom_call.1} parent=1 // pred_region
      %11 = vsyncadd [#allocation3], 0
      %s12 = sshll.u32 %s0, 4
      %s13 = int_to_ptr.hbm [resolvable:$true] %s12
      %s14 = sshll.u32 [#allocation2], 4
      %s15 = int_to_ptr.vmem [resolvable:$true] %s14
      %20 = dma.hbm_to_vmem [thread:$0]  %s13, 256, %s15, [#allocation3], 128, 128, 8
    $region5: #{tpu_custom_call.1} parent=1 // pred_fallthru
      _
    // Predicated region
    $region6: #{tpu_custom_call.1} parent=1 // pred_check
      _
    $region7: #{tpu_custom_call.1} parent=1 // pred_check_branch
      %22 = sbr.rel (0) target = $region9
    $region8: #{tpu_custom_call.1} parent=1 // pred_region
      %24 = dma.done [#allocation3], 256
    $region9: #{tpu_custom_call.1} parent=1 // pred_fallthru
      _
    %v25 = vld [vmem:[#allocation2] sm:$0xff]
    %v26 = vld [vmem:[#allocation2 + $0x8] sm:$0xff]
    %v27 = vceil.f32 %v25
    %v28 = vceil.f32 %v26
    %v29 = vand.u32 2147483647, %v27
    %v30 = vand.u32 2147483647, %v28
    %v31 = vmax.f32 %v29, %v30
    %32 = vmax.xlane.f32.xlu0 %v31
    %v33 = vpop.xlane.xlu0 %32
    %v34 = vrot.slane %v33, 4
    %v35 = vmax.f32 %v33, %v34
    %v36 = vrot.slane %v35, 2
    %v37 = vmax.f32 %v35, %v36
    %v38 = vrot.slane %v37, 1
    %v39 = vmax.f32 %v37, %v38
    %s40 = vtos %v39
    %v41 = vrcp.pop 127.0
    %v42 = vmul.f32 127.0, %v41
    %v43 = vsub.f32 1.0, %v42
    %v44 = vmul.f32 %v41, %v43
    %v45 = vadd.f32 %v41, %v44
    %vm46 = vweird.f32 %v41
    %v47 = vsel %vm46, %v41, %v45
    %s48 = vtos %v47
    %s49 = smul.f32 %s40, %s48
    %s50 = smax.f32 %s49, 1e-08
    %v51 = vstv %s50
    %v52 = vrcp.pop %v51
    %v53 = vmul.f32 %v51, %v52
    %v54 = vsub.f32 1.0, %v53
    %v55 = vmul.f32 %v52, %v54
    %v56 = vadd.f32 %v52, %v55
    %vm57 = vweird.f32 %v51
    %vm58 = vweird.f32 %v52
    %vm59 = vmor %vm57, %vm58
    %v60 = vsel %vm59, %v52, %v56
    %v61 = vand.u32 2147483647, %v51
    %vm62 = vcmp.eq.f32.partialorder %v61, 8.507059e+37
    %v63 = vand.u32 %v51, 2147483648
    %v64 = vor.u32 1.1754944e-38, %v63
    %v65 = vsel %vm62, %v64, %v60
    %s66 = vtos %v65
    %v67 = vstv %s66
    %v68 = vmul.f32 %v27, %v67
    %v69 = vmul.f32 %v28, %v67
    %v70 = vround.ne.pseudo %v68
    %v71 = vround.ne.pseudo %v69
    %v72 = vmax.f32 %v70, -128.0
    %v73 = vmax.f32 %v71, -128.0
    %v74 = vmin.f32 %v72, 127.0
    %v75 = vmin.f32 %v73, 127.0
    %v76 = vstv %s50
    %v77 = vmul.f32 %v74, %v76
    %v78 = vmul.f32 %v75, %v76
    %79 = vst [vmem:[#allocation5] sm:$0xff] %v77
    %80 = vst [vmem:[#allocation5 + $0x8] sm:$0xff] %v78
    // Predicated region
    $region10: #{tpu_custom_call.1} parent=1 // pred_check
      _
    $region11: #{tpu_custom_call.1} parent=1 // pred_check_branch
      %82 = sbr.rel (0) target = $region13
    $region12: #{tpu_custom_call.1} parent=1 // pred_region
      %84 = vsyncadd [#allocation4], 0
      %s85 = sshll.u32 [#allocation5], 4
      %s86 = int_to_ptr.vmem [resolvable:$true] %s85
      %s87 = sshll.u32 %s1, 4
      %s88 = int_to_ptr.hbm [resolvable:$true] %s87
      %93 = dma.vmem_to_hbm [thread:$0]  %s86, 256, %s88, [#allocation4], 128, 128, 8
    $region13: #{tpu_custom_call.1} parent=1 // pred_fallthru
      _
    // Predicated region
    $region14: #{tpu_custom_call.1} parent=1 // pred_check
      _
    $region15: #{tpu_custom_call.1} parent=1 // pred_check_branch
      %95 = sbr.rel (0) target = $region17
    $region16: #{tpu_custom_call.1} parent=1 // pred_region
      %97 = dma.done [#allocation4], 256
    $region17: #{tpu_custom_call.1} parent=1 // pred_fallthru
      _
    %98 = vsyncpa [#allocation3], 1
    %99 = vsyncpa [#allocation4], 1

</llo_original>
